<compile_context>
chip_gen: v6e
topology: v6e:2x2x1
jax: 0.10.0
libtpu: 0.0.40
codegen_flags: <defaults>
</compile_context>

<pallas_src>
import functools

import jax
import jax.numpy as jnp
from jax.experimental import pallas as pl
from jax.experimental.pallas import tpu as pltpu


def _blackout_kernel(yhat_ref, y_ref, ind_ref, loss_ref, *, k, eps):
    B, C = yhat_ref.shape
    yhat = yhat_ref[...].astype(jnp.float32)          # (B, C)  single in-kernel cast
    y = y_ref[...]                                    # (B, 1) int32
    ind = ind_ref[...]                                # (1, k) int32

    # Target logit via one masked lane-reduce: Yg[b] = yHat[b, y[b]].
    # (Out-of-range labels silently yield 0 instead of erroring like torch.gather.)
    cls = jax.lax.broadcasted_iota(jnp.int32, (B, C), 1)
    yg = jnp.sum(jnp.where(cls == y, yhat, 0.0), axis=1, keepdims=True)   # (B, 1)

    # Sampled "complement" logits via one-hot gather on the MXU.
    # masked_select removes the label column, so the effective class index is
    # ind + (ind >= y); encode the shift with two one-hot weight matrices
    # (no per-column loop, no lane-axis concatenate).
    cls_ck = jax.lax.broadcasted_iota(jnp.int32, (C, k), 0)               # class ids
    w_lo = (cls_ck == ind).astype(jnp.float32)                            # (C, k)
    w_hi = (cls_ck == (ind + 1)).astype(jnp.float32)                      # (C, k)
    p_lo = jnp.dot(yhat, w_lo, preferred_element_type=jnp.float32)        # (B, k)
    p_hi = jnp.dot(yhat, w_hi, preferred_element_type=jnp.float32)        # (B, k)
    complement = jnp.where(ind >= y, p_hi, p_lo)                          # (B, k)

    # Numerically-stable softmax over {yg, complement} without concatenating.
    m = jnp.maximum(yg, jnp.max(complement, axis=1, keepdims=True))       # (B, 1)
    e0 = jnp.exp(yg - m)                                                  # (B, 1)
    ec = jnp.exp(complement - m)                                          # (B, k)
    inv = pl.reciprocal(e0 + jnp.sum(ec, axis=1, keepdims=True))          # exact
    p0 = e0 * inv                                                         # (B, 1)
    pc = ec * inv                                                         # (B, k)

    # loss = -( mean(log p0)/(k+1) + mean(log(1-pc)) * k/(k+1) )
    #      = -( sum(log p0) + sum(log(1-pc)) ) / (B * (k+1))
    total = jnp.sum(jnp.log(p0 + eps)) + jnp.sum(jnp.log(1.0 - pc + eps))
    loss_ref[0, 0] = -total / (B * (k + 1))


def blackout1_loss(yhat, y, ind, *, k=5, classes=10, eps=1e-10):
    """Pallas implementation of blackout1.forward.

    yhat: (B, classes) float logits (native dtype, no wrapper up-cast),
    y: (B,) int labels, ind: (k,) int sampled indices in [0, classes-1).
    Returns scalar float32 loss.
    """
    B = yhat.shape[0]
    assert yhat.shape == (B, classes)
    y2d = y.astype(jnp.int32).reshape(B, 1)
    ind2d = ind.astype(jnp.int32).reshape(1, k)

    kernel = functools.partial(_blackout_kernel, k=k, eps=eps)
    loss = pl.pallas_call(
        kernel,
        out_shape=jax.ShapeDtypeStruct((1, 1), jnp.float32),
        in_specs=[
            pl.BlockSpec(memory_space=pltpu.MemorySpace.VMEM),
            pl.BlockSpec(memory_space=pltpu.MemorySpace.VMEM),
            pl.BlockSpec(memory_space=pltpu.MemorySpace.VMEM),
        ],
        out_specs=pl.BlockSpec(memory_space=pltpu.MemorySpace.SMEM),
    )(yhat, y2d, ind2d)
    return loss[0, 0]


def _reference_loss(yhat, y, ind, *, k=5, classes=10, eps=1e-10):
    # Pure-JAX mirror of the PyTorch forward (for correctness check only).
    Yg = jnp.take_along_axis(yhat, y[:, None], axis=1)
    j = jnp.arange(classes - 1)[None, :]
    idx = j + (j >= y[:, None]).astype(jnp.int32)
    Yg_ = jnp.take_along_axis(yhat, idx, axis=1)        # masked_select reshape
    complement = Yg_[:, ind]
    out = jnp.concatenate([Yg, complement], axis=1)
    out = out - jnp.max(out, axis=1, keepdims=True)
    out = jnp.exp(out)
    out = out / jnp.sum(out, axis=1, keepdims=True)
    return -(jnp.log(out + eps)[:, 0].mean() / (k + 1)
             + jnp.log(1.0 - out + eps)[:, 1:].mean() * k / (k + 1))


if __name__ == "__main__":
    k, classes, batch = 5, 10, 8
    key = jax.random.PRNGKey(0)
    k_yhat, k_y, k_ind = jax.random.split(key, 3)

    yhat = jax.random.normal(k_yhat, (batch, classes), dtype=jnp.float32)
    y = jax.random.randint(k_y, (batch,), 0, classes, dtype=jnp.int32)
    # torch.randint(0, classes-1, (k,)) -> deterministic JAX equivalent
    ind = jax.random.randint(k_ind, (k,), 0, classes - 1, dtype=jnp.int32)

    loss = jax.block_until_ready(
        blackout1_loss(yhat, y, ind, k=k, classes=classes))
    ref = _reference_loss(yhat, y, ind, k=k, classes=classes)

    assert jnp.isfinite(loss)
    assert jnp.allclose(loss, ref, rtol=1e-5, atol=1e-6), (loss, ref)
    print("KERNEL_OK")
</pallas_src>

<mosaic_0001>
module attributes {stable_mosaic.version = 11 : i64} {
  func.func @_blackout_kernel(%arg0: memref<8x10xf32, #tpu.memory_space<vmem>>, %arg1: memref<8x1xi32, #tpu.memory_space<vmem>>, %arg2: memref<1x5xi32, #tpu.memory_space<vmem>>, %arg3: memref<1x1xf32, #tpu.memory_space<smem>>) attributes {dimension_semantics = [], scalar_prefetch = 0 : i64, scratch_operands = 0 : i64, tpu.core_type = #tpu.core_type<tc>} {
    %c0 = arith.constant 0 : index
    %c0_0 = arith.constant 0 : index
    %0 = vector.load %arg0[%c0, %c0_0] : memref<8x10xf32, #tpu.memory_space<vmem>>, vector<8x10xf32>
    %c0_1 = arith.constant 0 : index
    %c0_2 = arith.constant 0 : index
    %1 = vector.load %arg1[%c0_1, %c0_2] : memref<8x1xi32, #tpu.memory_space<vmem>>, vector<8x1xi32>
    %c0_3 = arith.constant 0 : index
    %c0_4 = arith.constant 0 : index
    %2 = vector.load %arg2[%c0_3, %c0_4] : memref<1x5xi32, #tpu.memory_space<vmem>>, vector<1x5xi32>
    %3 = tpu.iota {dimensions = array<i32: 1>} : vector<8x10xi32>
    %4 = vector.broadcast %1 : vector<8x1xi32> to vector<8x10xi32>
    %5 = arith.cmpi eq, %3, %4 : vector<8x10xi32>
    %cst = arith.constant 0.000000e+00 : f32
    %6 = vector.broadcast %cst : f32 to vector<8x10xf32>
    %7 = arith.select %5, %0, %6 : vector<8x10xi1>, vector<8x10xf32>
    %cst_5 = arith.constant dense<0.000000e+00> : vector<8xf32>
    %8 = vector.multi_reduction <add>, %7, %cst_5 [1] : vector<8x10xf32> to vector<8xf32>
    %9 = vector.shape_cast %8 : vector<8xf32> to vector<8x1xf32>
    %10 = tpu.iota {dimensions = array<i32: 0>} : vector<10x5xi32>
    %11 = vector.broadcast %2 : vector<1x5xi32> to vector<10x5xi32>
    %12 = arith.cmpi eq, %10, %11 : vector<10x5xi32>
    %13 = arith.extui %12 : vector<10x5xi1> to vector<10x5xi32>
    %14 = arith.sitofp %13 : vector<10x5xi32> to vector<10x5xf32>
    %c1_i32 = arith.constant 1 : i32
    %15 = vector.broadcast %c1_i32 : i32 to vector<1x5xi32>
    %16 = arith.addi %2, %15 : vector<1x5xi32>
    %17 = vector.broadcast %16 : vector<1x5xi32> to vector<10x5xi32>
    %18 = arith.cmpi eq, %10, %17 : vector<10x5xi32>
    %19 = arith.extui %18 : vector<10x5xi1> to vector<10x5xi32>
    %20 = arith.sitofp %19 : vector<10x5xi32> to vector<10x5xf32>
    %cst_6 = arith.constant dense<0.000000e+00> : vector<8x5xf32>
    %21 = tpu.matmul %0, %14, %cst_6 {dimension_numbers = #tpu.dot_dimension_numbers<[1], [0], [0], [1], [0, 0, 1, 1], [], []>} : vector<8x10xf32>, vector<10x5xf32>, vector<8x5xf32> -> vector<8x5xf32>
    %cst_7 = arith.constant dense<0.000000e+00> : vector<8x5xf32>
    %22 = tpu.matmul %0, %20, %cst_7 {dimension_numbers = #tpu.dot_dimension_numbers<[1], [0], [0], [1], [0, 0, 1, 1], [], []>} : vector<8x10xf32>, vector<10x5xf32>, vector<8x5xf32> -> vector<8x5xf32>
    %23 = vector.broadcast %2 : vector<1x5xi32> to vector<8x5xi32>
    %24 = vector.broadcast %1 : vector<8x1xi32> to vector<8x5xi32>
    %25 = arith.cmpi sge, %23, %24 : vector<8x5xi32>
    %26 = arith.select %25, %22, %21 : vector<8x5xi1>, vector<8x5xf32>
    %cst_8 = arith.constant dense<0xFF800000> : vector<8xf32>
    %27 = vector.multi_reduction <maximumf>, %26, %cst_8 [1] : vector<8x5xf32> to vector<8xf32>
    %28 = vector.shape_cast %27 : vector<8xf32> to vector<8x1xf32>
    %29 = arith.maximumf %9, %28 : vector<8x1xf32>
    %30 = arith.subf %9, %29 : vector<8x1xf32>
    %31 = math.exp %30 : vector<8x1xf32>
    %32 = vector.broadcast %29 : vector<8x1xf32> to vector<8x5xf32>
    %33 = arith.subf %26, %32 : vector<8x5xf32>
    %34 = math.exp %33 : vector<8x5xf32>
    %cst_9 = arith.constant dense<0.000000e+00> : vector<8xf32>
    %35 = vector.multi_reduction <add>, %34, %cst_9 [1] : vector<8x5xf32> to vector<8xf32>
    %36 = vector.shape_cast %35 : vector<8xf32> to vector<8x1xf32>
    %37 = arith.addf %31, %36 : vector<8x1xf32>
    %38 = tpu.reciprocal %37 : vector<8x1xf32> -> vector<8x1xf32>
    %39 = arith.mulf %31, %38 : vector<8x1xf32>
    %40 = vector.broadcast %38 : vector<8x1xf32> to vector<8x5xf32>
    %41 = arith.mulf %34, %40 : vector<8x5xf32>
    %cst_10 = arith.constant 1.000000e-10 : f32
    %42 = vector.broadcast %cst_10 : f32 to vector<8x1xf32>
    %43 = arith.addf %39, %42 : vector<8x1xf32>
    %44 = math.log %43 : vector<8x1xf32>
    %45 = vector.shape_cast %44 : vector<8x1xf32> to vector<1x8x1xf32>
    %cst_11 = arith.constant dense<0.000000e+00> : vector<1xf32>
    %46 = vector.multi_reduction <add>, %45, %cst_11 [1, 2] : vector<1x8x1xf32> to vector<1xf32>
    %47 = vector.shape_cast %46 : vector<1xf32> to vector<1x1x1xf32>
    %48 = vector.extract %47[0, 0, 0] : f32 from vector<1x1x1xf32>
    %cst_12 = arith.constant 1.000000e+00 : f32
    %49 = vector.broadcast %cst_12 : f32 to vector<8x5xf32>
    %50 = arith.subf %49, %41 : vector<8x5xf32>
    %cst_13 = arith.constant 1.000000e-10 : f32
    %51 = vector.broadcast %cst_13 : f32 to vector<8x5xf32>
    %52 = arith.addf %50, %51 : vector<8x5xf32>
    %53 = math.log %52 : vector<8x5xf32>
    %54 = vector.shape_cast %53 : vector<8x5xf32> to vector<1x8x5xf32>
    %cst_14 = arith.constant dense<0.000000e+00> : vector<1xf32>
    %55 = vector.multi_reduction <add>, %54, %cst_14 [1, 2] : vector<1x8x5xf32> to vector<1xf32>
    %56 = vector.shape_cast %55 : vector<1xf32> to vector<1x1x1xf32>
    %57 = vector.extract %56[0, 0, 0] : f32 from vector<1x1x1xf32>
    %58 = arith.addf %48, %57 : f32
    %cst_15 = arith.constant 0.000000e+00 : f32
    %59 = arith.subf %cst_15, %58 : f32
    %cst_16 = arith.constant 4.800000e+01 : f32
    %60 = arith.divf %59, %cst_16 : f32
    %c0_17 = arith.constant 0 : index
    %c0_18 = arith.constant 0 : index
    %61 = memref.load %arg3[%c0_17, %c0_18] : memref<1x1xf32, #tpu.memory_space<smem>>
    memref.store %60, %arg3[%c0_17, %c0_18] : memref<1x1xf32, #tpu.memory_space<smem>>
    return
  }
}

</mosaic_0001>

<llo_original>
// kernel: tpu_custom_call.1
$region0: #{tpu_custom_call.1}
  #allocation0 [shape = 'u32[]', space=smem, size = 0x4, offset = 0x4, fixed_abs, tag = 'smem constant byte address 0x4 - core index']
  #allocation1 [shape = 'u32[144,128]{1,0:T(1,128)}', space=vmem, size = 0x12000, scoped, tag = 'internal scratch']
  %s0 = inlined_call_operand.vmem [shape: f32[8,10], index: 0, kind: input, shape index: {}]
  %s1 = inlined_call_operand.vmem [shape: s32[8,1], index: 1, kind: input, shape index: {}]
  %s2 = inlined_call_operand.vmem [shape: s32[1,5], index: 2, kind: input, shape index: {}]
  %s3 = inlined_call_operand.hbm [shape: f32[1,1], index: 3, kind: output, shape index: {}]
  %s4 = sld [smem:[#allocation0]]
  $region22: #{tpu_custom_call.1} parent=0
    _
  %s6 = ssub.s32 1, %s4
  %s7 = scalar_select 0, %s6, %s4
  $region1: #{tpu_custom_call.1} parent=0
    #allocation2 [shape = 'u8[512]{0}', space=smem, size = 0x200, scoped, tag = 'output window, operand 0, single buffered']
    #allocation3 [shape = 's32[1]{0}', space=sflag, size = 0x4, scoped, tag = 'scoped memory for tpu_custom_call.1']
    %8 = vsyncpa [#allocation3], 0
    // Predicated region
    $region2: #{tpu_custom_call.1} parent=1 // pred_check
      _
    $region3: #{tpu_custom_call.1} parent=1 // pred_check_branch
      %10 = sbr.rel (0) target = $region5
    $region4: #{tpu_custom_call.1} parent=1 // pred_region
      _
    $region5: #{tpu_custom_call.1} parent=1 // pred_fallthru
      _
    // Predicated region
    $region6: #{tpu_custom_call.1} parent=1 // pred_check
      _
    $region7: #{tpu_custom_call.1} parent=1 // pred_check_branch
      %12 = sbr.rel (0) target = $region9
    $region8: #{tpu_custom_call.1} parent=1 // pred_region
      _
    $region9: #{tpu_custom_call.1} parent=1 // pred_fallthru
      _
    // Predicated region
    $region10: #{tpu_custom_call.1} parent=1 // pred_check
      _
    $region11: #{tpu_custom_call.1} parent=1 // pred_check_branch
      %14 = sbr.rel (0) target = $region13
    $region12: #{tpu_custom_call.1} parent=1 // pred_region
      _
    $region13: #{tpu_custom_call.1} parent=1 // pred_fallthru
      _
    %v15 = vld [vmem:[%s0] sm:$0xff]
    %v16 = vld [vmem:[%s1] sm:$0xff]
    %v17 = vld [vmem:[%s2] sm:$0x1]
    %v18 = vlaneseq
    %v19 = vand.u32 %v18, 127
    %20 = vset.pattern.permute.xlu0 0
    %21 = vperm.xlu0 %20, %v16
    %v22 = vpop.permute.xlu0 %21
    %vm23 = vcmp.eq.s32.totalorder %v19, %v22
    %v24 = vsel %vm23, %v15, 0.0
    %vm25 = vcmask 80896
    %v26 = vsel %vm25, %v24, 0.0
    %27 = vadd.xlane.f32.xlu0 %v26
    %v28 = vpop.xlane.xlu0 %27
    %v29 = vlaneseq
    %v30 = vshrl.u32 %v29, 7
    %v31 = vadd.s32 %v30, 8
    %v32 = vlaneseq
    %v33 = vshrl.u32 %v32, 7
    %v34 = vsub.s32 0, %v33
    %v35 = vrot.slane %v17, %v34
    %vm36 = vcmp.eq.s32.totalorder %v30, %v35
    %vm37 = vcmp.eq.s32.totalorder %v31, %v35
    %v38 = vsel %vm36, 1, 0
    %v39 = vsel %vm37, 1, 0
    %v40 = vcvt.s32.f32 %v38
    %v41 = vcvt.s32.f32 %v39
    %v42 = vadd.s32 %v17, 1
    %v43 = vlaneseq
    %v44 = vshrl.u32 %v43, 7
    %v45 = vsub.s32 0, %v44
    %v46 = vrot.slane %v42, %v45
    %vm47 = vcmp.eq.s32.totalorder %v30, %v46
    %vm48 = vcmp.eq.s32.totalorder %v31, %v46
    %v49 = vsel %vm47, 1, 0
    %v50 = vsel %vm48, 1, 0
    %v51 = vcvt.s32.f32 %v49
    %v52 = vcvt.s32.f32 %v50
    %v54 = vsel %vm25, %v15, 0
    %vm56 = vcmask 1041408
    %v58 = vsel %vm56, %v41, 0
    %60 = vmatprep.subr.mxu0 0.0
    %61 = vmatpush1.msra.mxu0 0.0
    %62 = vmatprep.subr.mxu0 0.0
    %63 = vmatpush1.msra.mxu0 0.0
    %64 = vmatprep.subr.mxu0 0.0
    %65 = vmatpush1.msra.mxu0 0.0
    %66 = vmatprep.subr.mxu0 0.0
    %67 = vmatpush1.msra.mxu0 0.0
    %68 = vmatprep.subr.mxu0 0.0
    %69 = vmatpush1.msra.mxu0 0.0
    %70 = vmatprep.subr.mxu0 0.0
    %71 = vmatpush1.msra.mxu0 0.0
    %72 = vmatprep.subr.mxu0 0.0
    %73 = vmatpush1.msra.mxu0 0.0
    %74 = vmatprep.subr.mxu0 0.0
    %75 = vmatpush1.msra.mxu0 0.0
    %76 = vmatprep.subr.mxu0 0.0
    %77 = vmatpush1.msra.mxu0 0.0
    %78 = vmatprep.subr.mxu0 0.0
    %79 = vmatpush1.msra.mxu0 0.0
    %80 = vmatprep.subr.mxu0 0.0
    %81 = vmatpush1.msra.mxu0 0.0
    %82 = vmatprep.subr.mxu0 0.0
    %83 = vmatpush1.msra.mxu0 0.0
    %84 = vmatprep.subr.mxu0 0.0
    %85 = vmatpush1.msra.mxu0 0.0
    %86 = vmatprep.subr.mxu0 0.0
    %87 = vmatpush1.msra.mxu0 0.0
    %88 = vmatprep.subr.mxu0 0.0
    %89 = vmatpush1.msra.mxu0 %v58
    %90 = vmatprep.subr.mxu0 0.0
    %91 = vmatpush1.msra.mxu0 %v40
    %92 = vmatprep.subr.mxu0 0.0
    %93 = vmatpush2.msra.mxu0 0.0
    %94 = vmatprep.subr.mxu0 0.0
    %95 = vmatpush2.msra.mxu0 0.0
    %96 = vmatprep.subr.mxu0 0.0
    %97 = vmatpush2.msra.mxu0 0.0
    %98 = vmatprep.subr.mxu0 0.0
    %99 = vmatpush2.msra.mxu0 0.0
    %100 = vmatprep.subr.mxu0 0.0
    %101 = vmatpush2.msra.mxu0 0.0
    %102 = vmatprep.subr.mxu0 0.0
    %103 = vmatpush2.msra.mxu0 0.0
    %104 = vmatprep.subr.mxu0 0.0
    %105 = vmatpush2.msra.mxu0 0.0
    %106 = vmatprep.subr.mxu0 0.0
    %107 = vmatpush2.msra.mxu0 0.0
    %108 = vmatprep.subr.mxu0 0.0
    %109 = vmatpush2.msra.mxu0 0.0
    %110 = vmatprep.subr.mxu0 0.0
    %111 = vmatpush2.msra.mxu0 0.0
    %112 = vmatprep.subr.mxu0 0.0
    %113 = vmatpush2.msra.mxu0 0.0
    %114 = vmatprep.subr.mxu0 0.0
    %115 = vmatpush2.msra.mxu0 0.0
    %116 = vmatprep.subr.mxu0 0.0
    %117 = vmatpush2.msra.mxu0 0.0
    %118 = vmatprep.subr.mxu0 0.0
    %119 = vmatpush2.msra.mxu0 0.0
    %120 = vmatprep.subr.mxu0 0.0
    %121 = vmatpush2.msra.mxu0 0.0
    %122 = vmatprep.subr.mxu0 0.0
    %123 = vmatpush2.msra.mxu0 0.0
    %124 = vmatprep.mubr.f32.mxu0 0.0
    %125 = vmatmul.mubr.f32.gmra.mxu0 %v54
    %v126 = vpop.f32.mrf.mxu0
    %v127 = vadd.f32 0.0, %v126
    %v128 = vpop.f32.mrf.mxu0
    %129 = vdwg.mxu0
    %v131 = vsel %vm56, %v52, 0
    %133 = vmatprep.subr.mxu0 0.0
    %134 = vmatpush1.msra.mxu0 0.0
    %135 = vmatprep.subr.mxu0 0.0
    %136 = vmatpush1.msra.mxu0 0.0
    %137 = vmatprep.subr.mxu0 0.0
    %138 = vmatpush1.msra.mxu0 0.0
    %139 = vmatprep.subr.mxu0 0.0
    %140 = vmatpush1.msra.mxu0 0.0
    %141 = vmatprep.subr.mxu0 0.0
    %142 = vmatpush1.msra.mxu0 0.0
    %143 = vmatprep.subr.mxu0 0.0
    %144 = vmatpush1.msra.mxu0 0.0
    %145 = vmatprep.subr.mxu0 0.0
    %146 = vmatpush1.msra.mxu0 0.0
    %147 = vmatprep.subr.mxu0 0.0
    %148 = vmatpush1.msra.mxu0 0.0
    %149 = vmatprep.subr.mxu0 0.0
    %150 = vmatpush1.msra.mxu0 0.0
    %151 = vmatprep.subr.mxu0 0.0
    %152 = vmatpush1.msra.mxu0 0.0
    %153 = vmatprep.subr.mxu0 0.0
    %154 = vmatpush1.msra.mxu0 0.0
    %155 = vmatprep.subr.mxu0 0.0
    %156 = vmatpush1.msra.mxu0 0.0
    %157 = vmatprep.subr.mxu0 0.0
    %158 = vmatpush1.msra.mxu0 0.0
    %159 = vmatprep.subr.mxu0 0.0
    %160 = vmatpush1.msra.mxu0 0.0
    %161 = vmatprep.subr.mxu0 0.0
    %162 = vmatpush1.msra.mxu0 %v131
    %163 = vmatprep.subr.mxu0 0.0
    %164 = vmatpush1.msra.mxu0 %v51
    %165 = vmatprep.subr.mxu0 0.0
    %166 = vmatpush2.msra.mxu0 0.0
    %167 = vmatprep.subr.mxu0 0.0
    %168 = vmatpush2.msra.mxu0 0.0
    %169 = vmatprep.subr.mxu0 0.0
    %170 = vmatpush2.msra.mxu0 0.0
    %171 = vmatprep.subr.mxu0 0.0
    %172 = vmatpush2.msra.mxu0 0.0
    %173 = vmatprep.subr.mxu0 0.0
    %174 = vmatpush2.msra.mxu0 0.0
    %175 = vmatprep.subr.mxu0 0.0
    %176 = vmatpush2.msra.mxu0 0.0
    %177 = vmatprep.subr.mxu0 0.0
    %178 = vmatpush2.msra.mxu0 0.0
    %179 = vmatprep.subr.mxu0 0.0
    %180 = vmatpush2.msra.mxu0 0.0
    %181 = vmatprep.subr.mxu0 0.0
    %182 = vmatpush2.msra.mxu0 0.0
    %183 = vmatprep.subr.mxu0 0.0
    %184 = vmatpush2.msra.mxu0 0.0
    %185 = vmatprep.subr.mxu0 0.0
    %186 = vmatpush2.msra.mxu0 0.0
    %187 = vmatprep.subr.mxu0 0.0
    %188 = vmatpush2.msra.mxu0 0.0
    %189 = vmatprep.subr.mxu0 0.0
    %190 = vmatpush2.msra.mxu0 0.0
    %191 = vmatprep.subr.mxu0 0.0
    %192 = vmatpush2.msra.mxu0 0.0
    %193 = vmatprep.subr.mxu0 0.0
    %194 = vmatpush2.msra.mxu0 0.0
    %195 = vmatprep.subr.mxu0 0.0
    %196 = vmatpush2.msra.mxu0 0.0
    %197 = vmatprep.mubr.f32.mxu0 0.0
    %198 = vmatmul.mubr.f32.gmra.mxu0 %v54
    %v199 = vpop.f32.mrf.mxu0
    %v200 = vadd.f32 0.0, %v199
    %v201 = vpop.f32.mrf.mxu0
    %202 = vdwg.mxu0
    %vm203 = vcmp.ge.s32.totalorder %v35, %v22
    %v204 = vsel %vm203, %v200, %v127
    %vm205 = vcmask 39936
    %v206 = vsel %vm205, %v204, -inf
    %207 = vmax.xlane.f32.xlu0 %v206
    %v208 = vpop.xlane.xlu0 %207
    %v209 = vmax.f32 %v28, %v208
    %v210 = vsub.f32 %v28, %v209
    %v211 = vmul.f32 %v210, 1.442695
    %v212 = vpow.pop %v211
    %v213 = vsub.f32 %v204, %v209
    %v214 = vmul.f32 %v213, 1.442695
    %v215 = vpow.pop %v214
    %v216 = vsel %vm205, %v215, 0.0
    %217 = vadd.xlane.f32.xlu0 %v216
    %v218 = vpop.xlane.xlu0 %217
    %v219 = vadd.f32 %v212, %v218
    %v220 = vrcp.pop %v219
    %v221 = vmul.f32 %v212, %v220
    %v222 = vmul.f32 %v215, %v220
    %v223 = vadd.f32 %v221, 1e-10
    %v224 = vlog2.pop %v223
    %v225 = vmul.f32 %v224, 0.6931472
    %vm226 = vcmask 7168
    %v227 = vsel %vm226, %v225, 0.0
    %228 = vadd.xlane.f32.xlu0 %v227
    %v229 = vpop.xlane.xlu0 %228
    %v230 = vrot.slane %v229, 4
    %v231 = vadd.f32 %v229, %v230
    %v232 = vrot.slane %v231, 2
    %v233 = vadd.f32 %v231, %v232
    %v234 = vrot.slane %v233, 1
    %v235 = vadd.f32 %v233, %v234
    %s236 = vtos %v235
    %v237 = vsub.f32 1.0, %v222
    %v238 = vadd.f32 %v237, 1e-10
    %v239 = vlog2.pop %v238
    %v240 = vmul.f32 %v239, 0.6931472
    %v241 = vsel %vm205, %v240, 0.0
    %242 = vadd.xlane.f32.xlu0 %v241
    %v243 = vpop.xlane.xlu0 %242
    %v244 = vrot.slane %v243, 4
    %v245 = vadd.f32 %v243, %v244
    %v246 = vrot.slane %v245, 2
    %v247 = vadd.f32 %v245, %v246
    %v248 = vrot.slane %v247, 1
    %v249 = vadd.f32 %v247, %v248
    %s250 = vtos %v249
    %s251 = sadd.f32 %s236, %s250
    %s252 = ssub.f32 0.0, %s251
    %v253 = vrcp.pop 48.0
    %s254 = vtos %v253
    %s255 = smul.f32 %s252, %s254
    %s256 = scalar_lea.smem [#allocation2], 0
    %257 = sst [smem:[%s256]] %s255
    // Predicated region
    $region14: #{tpu_custom_call.1} parent=1 // pred_check
      _
    $region15: #{tpu_custom_call.1} parent=1 // pred_check_branch
      %259 = sbr.rel (0) target = $region17
    $region16: #{tpu_custom_call.1} parent=1 // pred_region
      %s261 = ssub.s32 16, 16
      %262 = vsyncadd [#allocation3], %s261
      %265 = dma.smem_to_hbm [#allocation2], 16, %s3, [#allocation3]
    $region17: #{tpu_custom_call.1} parent=1 // pred_fallthru
      _
    // Predicated region
    $region18: #{tpu_custom_call.1} parent=1 // pred_check
      _
    $region19: #{tpu_custom_call.1} parent=1 // pred_check_branch
      %267 = sbr.rel (0) target = $region21
    $region20: #{tpu_custom_call.1} parent=1 // pred_region
      %268 = dma.done [#allocation3], 16
    $region21: #{tpu_custom_call.1} parent=1 // pred_fallthru
      _
    %269 = sfence
    %270 = vsyncpa [#allocation3], 1

</llo_original>
